<compile_context>
chip_gen: v5e
topology: v5e:2x2
jax: 0.10.0
libtpu: 0.0.40
codegen_flags: <defaults>
</compile_context>

<pallas_src>
import math

import jax
import jax.numpy as jnp
from jax.experimental import pallas as pl
from jax.experimental.pallas import tpu as pltpu


def _round_up(v: int, m: int) -> int:
    return ((v + m - 1) // m) * m


# ----------------------------------------------------------------------------
# Kernels
# ----------------------------------------------------------------------------
def _lora_kernel_fullk(x_ref, w_ref, b_ref, xa_ref, lb_ref, o_ref):
    # x:(tm,K)  w:(K,tn)  b:(1,tn) f32  xa:(tm,r_pad)  lb:(r_pad,tn) -> o:(tm,tn)
    acc = jnp.dot(x_ref[...], w_ref[...], preferred_element_type=jnp.float32)
    acc = acc + jnp.dot(xa_ref[...], lb_ref[...],
                        preferred_element_type=jnp.float32)
    o_ref[...] = (acc + b_ref[...]).astype(o_ref.dtype)


def _lora_kernel_tiledk(x_ref, w_ref, b_ref, xa_ref, lb_ref, o_ref, acc_ref):
    # Fallback when in_features is too large to hold a full-K tile in VMEM.
    k = pl.program_id(2)

    @pl.when(k == 0)
    def _init():
        acc_ref[...] = jnp.zeros_like(acc_ref)

    acc_ref[...] += jnp.dot(x_ref[...], w_ref[...],
                            preferred_element_type=jnp.float32)

    @pl.when(k == pl.num_programs(2) - 1)
    def _epilogue():
        delta = jnp.dot(xa_ref[...], lb_ref[...],
                        preferred_element_type=jnp.float32)
        o_ref[...] = (acc_ref[...] + b_ref[...] + delta).astype(o_ref.dtype)


# ----------------------------------------------------------------------------
# One-time preparation of the frozen parameters (pad / cast / transpose once).
# ----------------------------------------------------------------------------
def prepare_lora_params(w, bias, lora_A, lora_B, *,
                        compute_dtype=jnp.bfloat16,
                        tn=512, tk=2048, tm_cap=256,
                        vmem_budget_bytes=28 * 1024 * 1024,
                        force_k_tiling=False):
    out_features, in_features = w.shape
    rank = lora_A.shape[0]
    assert lora_A.shape == (rank, in_features)
    assert lora_B.shape == (out_features, rank)
    assert bias.shape == (out_features,)

    cd = jnp.dtype(compute_dtype) if compute_dtype is not None else jnp.dtype(w.dtype)
    itemsize = cd.itemsize

    r_pad = _round_up(rank, 128)                     # lane-dense LoRA operands
    n_align = _round_up(out_features, 128)
    tn = _round_up(min(tn, n_align), 128)
    n_pad = _round_up(out_features, tn)

    k_align = _round_up(in_features, 128)
    # Double-buffered x + W footprint if the whole K dim is one tile.
    fullk_bytes = 2 * (tm_cap + tn) * k_align * itemsize
    if (not force_k_tiling) and fullk_bytes <= vmem_budget_bytes:
        tk_eff = k_align                              # collapse the K grid axis
    else:
        tk_eff = min(_round_up(tk, 128), k_align)
    k_pad = _round_up(in_features, tk_eff)

    # Frozen operands: pad / cast / transpose once, amortized over all calls.
    w_t = jnp.pad(w.astype(cd).T,
                  ((0, k_pad - in_features), (0, n_pad - out_features)))       # (K, N)
    b_p = jnp.pad(bias.astype(jnp.float32),
                  (0, n_pad - out_features)).reshape(1, n_pad)                 # (1, N) f32
    la_t = lora_A.astype(cd).T                                                 # (in, r)
    lb_t = jnp.pad(lora_B.astype(cd).T,
                   ((0, r_pad - rank), (0, n_pad - out_features)))             # (r_pad, N)

    return dict(
        w_t=w_t, bias=b_p, lora_A_t=la_t, lora_B_t=lb_t,
        in_features=in_features, out_features=out_features, rank=rank,
        r_pad=r_pad, n_pad=n_pad, k_pad=k_pad,
        tn=tn, tk=tk_eff, tm_cap=tm_cap, compute_dtype=cd,
    )


# ----------------------------------------------------------------------------
# Per-call forward
# ----------------------------------------------------------------------------
def lora_adapter_forward(x, params, scale=1.0, *, tm=256, out_dtype=None):
    batch, in_features = x.shape
    assert in_features == params["in_features"]
    out_features = params["out_features"]
    cd = params["compute_dtype"]
    out_dtype = jnp.dtype(out_dtype) if out_dtype is not None else x.dtype

    tn, tk = params["tn"], params["tk"]
    n_pad, k_pad, r_pad = params["n_pad"], params["k_pad"], params["r_pad"]

    tm = min(tm, params["tm_cap"], _round_up(batch, 8))
    tm = _round_up(tm, 8)
    m_pad = _round_up(batch, tm)

    x_c = x.astype(cd)
    # LoRA down-projection: tiny (batch, rank) XLA matmul; scale folded in here,
    # so no scalar-prefetch argument is needed in the kernel.
    xa = jnp.dot(x_c, params["lora_A_t"], preferred_element_type=jnp.float32)
    xa = (xa * jnp.float32(scale)).astype(cd)

    x_p = jnp.pad(x_c, ((0, m_pad - batch), (0, k_pad - in_features)))
    xa_p = jnp.pad(xa, ((0, m_pad - batch), (0, r_pad - params["rank"])))

    gi, gj, gk = m_pad // tm, n_pad // tn, k_pad // tk

    if gk == 1:
        grid = (gi, gj)
        kernel = _lora_kernel_fullk
        in_specs = [
            pl.BlockSpec((tm, k_pad), lambda i, j: (i, 0)),    # x
            pl.BlockSpec((k_pad, tn), lambda i, j: (0, j)),    # W^T  (K, N)
            pl.BlockSpec((1, tn), lambda i, j: (0, j)),        # bias
            pl.BlockSpec((tm, r_pad), lambda i, j: (i, 0)),    # xa = scale * x A^T
            pl.BlockSpec((r_pad, tn), lambda i, j: (0, j)),    # B^T
        ]
        out_specs = pl.BlockSpec((tm, tn), lambda i, j: (i, j))
        scratch = []
        dims = ("parallel", "parallel")
    else:
        grid = (gi, gj, gk)
        kernel = _lora_kernel_tiledk
        in_specs = [
            pl.BlockSpec((tm, tk), lambda i, j, k: (i, k)),
            pl.BlockSpec((tk, tn), lambda i, j, k: (k, j)),
            pl.BlockSpec((1, tn), lambda i, j, k: (0, j)),
            pl.BlockSpec((tm, r_pad), lambda i, j, k: (i, 0)),
            pl.BlockSpec((r_pad, tn), lambda i, j, k: (0, j)),
        ]
        out_specs = pl.BlockSpec((tm, tn), lambda i, j, k: (i, j))
        scratch = [pltpu.VMEM((tm, tn), jnp.float32)]
        dims = ("parallel", "parallel", "arbitrary")

    out = pl.pallas_call(
        kernel,
        out_shape=jax.ShapeDtypeStruct((m_pad, n_pad), out_dtype),
        grid_spec=pltpu.PrefetchScalarGridSpec(
            num_scalar_prefetch=0,
            grid=grid,
            in_specs=in_specs,
            out_specs=out_specs,
            scratch_shapes=scratch,
        ),
        compiler_params=pltpu.CompilerParams(
            dimension_semantics=dims,
            vmem_limit_bytes=48 * 1024 * 1024,
        ),
    )(x_p, params["w_t"], params["bias"], xa_p, params["lora_B_t"])

    return out[:batch, :out_features]


def reference_forward(x, w, bias, lora_A, lora_B, scale=1.0):
    orig = x @ w.T + bias
    delta = lora_B @ lora_A @ x.T          # (out, batch)
    return orig + scale * delta.T


if __name__ == "__main__":
    key = jax.random.PRNGKey(0)
    k_x, k_w, k_b, k_a, k_bb, k_x2, k_w2, k_b2, k_a2, k_bb2 = jax.random.split(key, 10)

    # --- Main (small) config -------------------------------------------------
    batch, in_features, out_features, rank, scale = 8, 32, 32, 4, 0.5

    w = jax.random.normal(k_w, (out_features, in_features), jnp.float32) * 0.1
    bias = jax.random.normal(k_b, (out_features,), jnp.float32) * 0.1

    # LoRA init per __init__: kaiming_uniform_(a=sqrt(5)) for A, zeros for B.
    a_neg_slope = math.sqrt(5.0)
    gain = math.sqrt(2.0 / (1.0 + a_neg_slope ** 2))
    bound = gain * math.sqrt(3.0 / in_features)
    lora_A = jax.random.uniform(k_a, (rank, in_features), jnp.float32,
                                minval=-bound, maxval=bound)
    lora_B_init = jnp.zeros((out_features, rank), jnp.float32)
    lora_B_trained = jax.random.normal(k_bb, (out_features, rank), jnp.float32) * 0.1

    x = jax.random.normal(k_x, (batch, in_features), jnp.float32)

    # 1) f32 compute path, init-faithful (lora_B == 0) — exact.
    p_f32_init = prepare_lora_params(w, bias, lora_A, lora_B_init,
                                     compute_dtype=jnp.float32)
    out0 = jax.block_until_ready(lora_adapter_forward(x, p_f32_init, scale=scale))
    ref0 = reference_forward(x, w, bias, lora_A, lora_B_init, scale=scale)
    assert out0.shape == (batch, out_features)
    assert out0.dtype == x.dtype
    assert jnp.allclose(out0, ref0, atol=1e-4, rtol=1e-4), "f32 init mismatch"

    # 2) f32 compute path, non-zero lora_B — exact.
    p_f32 = prepare_lora_params(w, bias, lora_A, lora_B_trained,
                                compute_dtype=jnp.float32)
    out1 = jax.block_until_ready(lora_adapter_forward(x, p_f32, scale=scale))
    ref1 = reference_forward(x, w, bias, lora_A, lora_B_trained, scale=scale)
    assert jnp.allclose(out1, ref1, atol=1e-4, rtol=1e-4), "f32 lora mismatch"

    # 3) Default bf16 MXU compute path (f32 accumulate) — loose tolerance.
    p_bf16 = prepare_lora_params(w, bias, lora_A, lora_B_trained)
    out2 = jax.block_until_ready(lora_adapter_forward(x, p_bf16, scale=scale))
    assert jnp.allclose(out2, ref1, atol=5e-2, rtol=5e-2), "bf16 mismatch"

    # 4) Forced K-tiled accumulation path (large-K fallback kernel) — exact.
    b2, in2, out2f, r2 = 8, 384, 256, 4
    w2 = jax.random.normal(k_w2, (out2f, in2), jnp.float32) * 0.05
    bias2 = jax.random.normal(k_b2, (out2f,), jnp.float32) * 0.1
    lora_A2 = jax.random.normal(k_a2, (r2, in2), jnp.float32) * 0.05
    lora_B2 = jax.random.normal(k_bb2, (out2f, r2), jnp.float32) * 0.1
    x2 = jax.random.normal(k_x2, (b2, in2), jnp.float32)
    p_tiled = prepare_lora_params(w2, bias2, lora_A2, lora_B2,
                                  compute_dtype=jnp.float32,
                                  tn=128, tk=128, force_k_tiling=True)
    out3 = jax.block_until_ready(lora_adapter_forward(x2, p_tiled, scale=scale))
    ref3 = reference_forward(x2, w2, bias2, lora_A2, lora_B2, scale=scale)
    assert out3.shape == (b2, out2f)
    assert jnp.allclose(out3, ref3, atol=1e-4, rtol=1e-4), "tiled-K mismatch"

    print("KERNEL_OK")
</pallas_src>

<mosaic_0001>
module attributes {stable_mosaic.version = 11 : i64} {
  func.func @_lora_kernel_fullk(%arg0: i32, %arg1: i32, %arg2: memref<8x128xf32, #tpu.memory_space<vmem>>, %arg3: memref<128x128xf32, #tpu.memory_space<vmem>>, %arg4: memref<1x128xf32, #tpu.memory_space<vmem>>, %arg5: memref<8x128xf32, #tpu.memory_space<vmem>>, %arg6: memref<128x128xf32, #tpu.memory_space<vmem>>, %arg7: memref<8x128xf32, #tpu.memory_space<vmem>>) attributes {dimension_semantics = [#tpu.dimension_semantics<parallel>, #tpu.dimension_semantics<parallel>], iteration_bounds = array<i64: 1, 1>, scalar_prefetch = 0 : i64, scratch_operands = 0 : i64, tpu.core_type = #tpu.core_type<tc>, window_params = [{transform_indices = @transform_0, window_bounds = array<i64: 8, 128>}, {transform_indices = @transform_1, window_bounds = array<i64: 128, 128>}, {transform_indices = @transform_2, window_bounds = array<i64: 1, 128>}, {transform_indices = @transform_3, window_bounds = array<i64: 8, 128>}, {transform_indices = @transform_4, window_bounds = array<i64: 128, 128>}, {transform_indices = @transform_5, window_bounds = array<i64: 8, 128>}]} {
    %c0 = arith.constant 0 : index
    %c0_0 = arith.constant 0 : index
    %0 = vector.load %arg2[%c0, %c0_0] : memref<8x128xf32, #tpu.memory_space<vmem>>, vector<8x128xf32>
    %c0_1 = arith.constant 0 : index
    %c0_2 = arith.constant 0 : index
    %1 = vector.load %arg3[%c0_1, %c0_2] : memref<128x128xf32, #tpu.memory_space<vmem>>, vector<128x128xf32>
    %cst = arith.constant dense<0.000000e+00> : vector<8x128xf32>
    %2 = tpu.matmul %0, %1, %cst {dimension_numbers = #tpu.dot_dimension_numbers<[1], [0], [0], [1], [0, 0, 1, 1], [], []>} : vector<8x128xf32>, vector<128x128xf32>, vector<8x128xf32> -> vector<8x128xf32>
    %c0_3 = arith.constant 0 : index
    %c0_4 = arith.constant 0 : index
    %3 = vector.load %arg5[%c0_3, %c0_4] : memref<8x128xf32, #tpu.memory_space<vmem>>, vector<8x128xf32>
    %c0_5 = arith.constant 0 : index
    %c0_6 = arith.constant 0 : index
    %4 = vector.load %arg6[%c0_5, %c0_6] : memref<128x128xf32, #tpu.memory_space<vmem>>, vector<128x128xf32>
    %cst_7 = arith.constant dense<0.000000e+00> : vector<8x128xf32>
    %5 = tpu.matmul %3, %4, %cst_7 {dimension_numbers = #tpu.dot_dimension_numbers<[1], [0], [0], [1], [0, 0, 1, 1], [], []>} : vector<8x128xf32>, vector<128x128xf32>, vector<8x128xf32> -> vector<8x128xf32>
    %6 = arith.addf %2, %5 : vector<8x128xf32>
    %c0_8 = arith.constant 0 : index
    %c0_9 = arith.constant 0 : index
    %7 = vector.load %arg4[%c0_8, %c0_9] : memref<1x128xf32, #tpu.memory_space<vmem>>, vector<1x128xf32>
    %8 = vector.broadcast %7 : vector<1x128xf32> to vector<8x128xf32>
    %9 = arith.addf %6, %8 : vector<8x128xf32>
    %c0_10 = arith.constant 0 : index
    %c0_11 = arith.constant 0 : index
    %10 = vector.load %arg7[%c0_10, %c0_11] : memref<8x128xf32, #tpu.memory_space<vmem>>, vector<8x128xf32>
    tpu.vector_store %arg7[%c0_10, %c0_11], %9 {strides = array<i32>} : memref<8x128xf32, #tpu.memory_space<vmem>>, vector<8x128xf32>,
    return
  }
  func.func @transform_0(%arg0: i32, %arg1: i32) -> (i32, i32) {
    %c0_i32 = arith.constant 0 : i32
    %c0_i32_0 = arith.constant 0 : i32
    return %arg0, %c0_i32 : i32, i32
  }
  func.func @transform_1(%arg0: i32, %arg1: i32) -> (i32, i32) {
    %c0_i32 = arith.constant 0 : i32
    %c0_i32_0 = arith.constant 0 : i32
    return %c0_i32, %arg1 : i32, i32
  }
  func.func @transform_2(%arg0: i32, %arg1: i32) -> (i32, i32) {
    %c0_i32 = arith.constant 0 : i32
    %c0_i32_0 = arith.constant 0 : i32
    return %c0_i32, %arg1 : i32, i32
  }
  func.func @transform_3(%arg0: i32, %arg1: i32) -> (i32, i32) {
    %c0_i32 = arith.constant 0 : i32
    %c0_i32_0 = arith.constant 0 : i32
    return %arg0, %c0_i32 : i32, i32
  }
  func.func @transform_4(%arg0: i32, %arg1: i32) -> (i32, i32) {
    %c0_i32 = arith.constant 0 : i32
    %c0_i32_0 = arith.constant 0 : i32
    return %c0_i32, %arg1 : i32, i32
  }
  func.func @transform_5(%arg0: i32, %arg1: i32) -> (i32, i32) {
    %c0_i32 = arith.constant 0 : i32
    return %arg0, %arg1 : i32, i32
  }
}

</mosaic_0001>

<llo_original>
// kernel: tpu_custom_call.1
$region0: #{tpu_custom_call.1}
  #allocation0 [shape = 'u32[]', space=smem, size = 0x4, offset = 0x4, fixed_abs, tag = 'smem constant byte address 0x4 - core index']
  #allocation1 [shape = 'u32[72,128]{1,0:T(1,128)}', space=vmem, size = 0x9000, scoped, tag = 'internal scratch']
  %s0 = inlined_call_operand.hbm [shape: f32[8,128], index: 0, kind: input, shape index: {}]
  %s1 = inlined_call_operand.hbm [shape: f32[128,128], index: 1, kind: input, shape index: {}]
  %s2 = inlined_call_operand.vmem [shape: f32[1,128], index: 2, kind: input, shape index: {}]
  %s3 = inlined_call_operand.hbm [shape: f32[8,128], index: 3, kind: input, shape index: {}]
  %s4 = inlined_call_operand.hbm [shape: f32[128,128], index: 4, kind: input, shape index: {}]
  %s5 = inlined_call_operand.hbm [shape: f32[8,128], index: 5, kind: output, shape index: {}]
  %s6 = sld [smem:[#allocation0]]
  $region46: #{tpu_custom_call.1} parent=0
    _
  %s8 = ssub.s32 1, %s6
  %s9 = scalar_select 0, %s8, %s6
  $region1: #{tpu_custom_call.1} parent=0
    #allocation2 [shape = 'u8[4096]{0}', space=vmem, size = 0x1000, scoped, tag = 'input window, operand 0, single buffered']
    #allocation3 [shape = 's32[1]{0}', space=sflag, size = 0x4, scoped, tag = 'scoped memory for tpu_custom_call.1']
    #allocation4 [shape = 's32[1]{0}', space=sflag, size = 0x4, scoped, tag = 'scoped memory for tpu_custom_call.1']
    #allocation5 [shape = 'u8[65536]{0}', space=vmem, size = 0x10000, scoped, tag = 'input window, operand 1, single buffered']
    #allocation6 [shape = 's32[1]{0}', space=sflag, size = 0x4, scoped, tag = 'scoped memory for tpu_custom_call.1']
    #allocation7 [shape = 'u8[4096]{0}', space=vmem, size = 0x1000, scoped, tag = 'input window, operand 3, single buffered']
    #allocation8 [shape = 'u8[65536]{0}', space=vmem, size = 0x10000, scoped, tag = 'input window, operand 4, single buffered']
    #allocation9 [shape = 's32[1]{0}', space=sflag, size = 0x4, scoped, tag = 'scoped memory for tpu_custom_call.1']
    #allocation10 [shape = 'u8[4096]{0}', space=vmem, size = 0x1000, scoped, tag = 'output window, operand 0, single buffered']
    %10 = vsyncpa [#allocation3], 0
    %11 = vsyncpa [#allocation6], 0
    %12 = vsyncpa [#allocation9], 0
    %13 = vsyncpa [#allocation4], 0
    // Predicated region
    $region2: #{tpu_custom_call.1} parent=1 // pred_check
      _
    $region3: #{tpu_custom_call.1} parent=1 // pred_check_branch
      %15 = sbr.rel (0) target = $region5
    $region4: #{tpu_custom_call.1} parent=1 // pred_region
      %17 = vsyncadd [#allocation3], 0
      %s19 = sshll.u32 %s0, 4
      %s20 = int_to_ptr.hbm [resolvable:$true] %s19
      %s21 = sshll.u32 [#allocation2], 4
      %s22 = int_to_ptr.vmem [resolvable:$true] %s21
      %24 = dma.hbm_to_vmem [thread:$0]  %s20, 128, %s22, [#allocation3]
    $region5: #{tpu_custom_call.1} parent=1 // pred_fallthru
      _
    // Predicated region
    $region6: #{tpu_custom_call.1} parent=1 // pred_check
      _
    $region7: #{tpu_custom_call.1} parent=1 // pred_check_branch
      %26 = sbr.rel (0) target = $region9
    $region8: #{tpu_custom_call.1} parent=1 // pred_region
      %28 = vsyncadd [#allocation6], 0
      %s29 = sshll.u32 %s1, 4
      %s30 = int_to_ptr.hbm [resolvable:$true] %s29
      %s31 = sshll.u32 [#allocation5], 4
      %s32 = int_to_ptr.vmem [resolvable:$true] %s31
      %37 = dma.hbm_to_vmem [thread:$0]  %s30, 2048, %s32, [#allocation6], 128, 128, 8
    $region9: #{tpu_custom_call.1} parent=1 // pred_fallthru
      _
    // Predicated region
    $region10: #{tpu_custom_call.1} parent=1 // pred_check
      _
    $region11: #{tpu_custom_call.1} parent=1 // pred_check_branch
      %39 = sbr.rel (0) target = $region13
    $region12: #{tpu_custom_call.1} parent=1 // pred_region
      _
    $region13: #{tpu_custom_call.1} parent=1 // pred_fallthru
      _
    // Predicated region
    $region14: #{tpu_custom_call.1} parent=1 // pred_check
      _
    $region15: #{tpu_custom_call.1} parent=1 // pred_check_branch
      %41 = sbr.rel (0) target = $region17
    $region16: #{tpu_custom_call.1} parent=1 // pred_region
      %43 = vsyncadd [#allocation6], 0
      %s45 = sshll.u32 %s3, 4
      %s46 = int_to_ptr.hbm [resolvable:$true] %s45
      %s47 = sshll.u32 [#allocation7], 4
      %s48 = int_to_ptr.vmem [resolvable:$true] %s47
      %50 = dma.hbm_to_vmem [thread:$0]  %s46, 128, %s48, [#allocation6]
    $region17: #{tpu_custom_call.1} parent=1 // pred_fallthru
      _
    // Predicated region
    $region18: #{tpu_custom_call.1} parent=1 // pred_check
      _
    $region19: #{tpu_custom_call.1} parent=1 // pred_check_branch
      %52 = sbr.rel (0) target = $region21
    $region20: #{tpu_custom_call.1} parent=1 // pred_region
      %54 = vsyncadd [#allocation9], 0
      %s55 = sshll.u32 %s4, 4
      %s56 = int_to_ptr.hbm [resolvable:$true] %s55
      %s57 = sshll.u32 [#allocation8], 4
      %s58 = int_to_ptr.vmem [resolvable:$true] %s57
      %63 = dma.hbm_to_vmem [thread:$0]  %s56, 2048, %s58, [#allocation9], 128, 128, 8
    $region21: #{tpu_custom_call.1} parent=1 // pred_fallthru
      _
    // Predicated region
    $region22: #{tpu_custom_call.1} parent=1 // pred_check
      _
    $region23: #{tpu_custom_call.1} parent=1 // pred_check_branch
      %65 = sbr.rel (0) target = $region25
    $region24: #{tpu_custom_call.1} parent=1 // pred_region
      %67 = dma.done [#allocation3], 128
    $region25: #{tpu_custom_call.1} parent=1 // pred_fallthru
      _
    // Predicated region
    $region26: #{tpu_custom_call.1} parent=1 // pred_check
      _
    $region27: #{tpu_custom_call.1} parent=1 // pred_check_branch
      %69 = sbr.rel (0) target = $region29
    $region28: #{tpu_custom_call.1} parent=1 // pred_region
      %71 = dma.done [#allocation6], 2048
    $region29: #{tpu_custom_call.1} parent=1 // pred_fallthru
      _
    // Predicated region
    $region30: #{tpu_custom_call.1} parent=1 // pred_check
      _
    $region31: #{tpu_custom_call.1} parent=1 // pred_check_branch
      %73 = sbr.rel (0) target = $region33
    $region32: #{tpu_custom_call.1} parent=1 // pred_region
      %75 = dma.done [#allocation6], 128
    $region33: #{tpu_custom_call.1} parent=1 // pred_fallthru
      _
    // Predicated region
    $region34: #{tpu_custom_call.1} parent=1 // pred_check
      _
    $region35: #{tpu_custom_call.1} parent=1 // pred_check_branch
      %77 = sbr.rel (0) target = $region37
    $region36: #{tpu_custom_call.1} parent=1 // pred_region
      %79 = dma.done [#allocation9], 2048
    $region37: #{tpu_custom_call.1} parent=1 // pred_fallthru
      _
    %v80 = vld [vmem:[#allocation2] sm:$0xff]
    %v81 = vld [vmem:[#allocation5] sm:$0xff]
    %v82 = vld [vmem:[#allocation5 + $0x8] sm:$0xff]
    %v83 = vld [vmem:[#allocation5 + $0x10] sm:$0xff]
    %v84 = vld [vmem:[#allocation5 + $0x18] sm:$0xff]
    %v85 = vld [vmem:[#allocation5 + $0x20] sm:$0xff]
    %v86 = vld [vmem:[#allocation5 + $0x28] sm:$0xff]
    %v87 = vld [vmem:[#allocation5 + $0x30] sm:$0xff]
    %v88 = vld [vmem:[#allocation5 + $0x38] sm:$0xff]
    %v89 = vld [vmem:[#allocation5 + $0x40] sm:$0xff]
    %v90 = vld [vmem:[#allocation5 + $0x48] sm:$0xff]
    %v91 = vld [vmem:[#allocation5 + $0x50] sm:$0xff]
    %v92 = vld [vmem:[#allocation5 + $0x58] sm:$0xff]
    %v93 = vld [vmem:[#allocation5 + $0x60] sm:$0xff]
    %v94 = vld [vmem:[#allocation5 + $0x68] sm:$0xff]
    %v95 = vld [vmem:[#allocation5 + $0x70] sm:$0xff]
    %v96 = vld [vmem:[#allocation5 + $0x78] sm:$0xff]
    %v97 = vld [vmem:[#allocation7] sm:$0xff]
    %v98 = vld [vmem:[#allocation8] sm:$0xff]
    %v99 = vld [vmem:[#allocation8 + $0x8] sm:$0xff]
    %v100 = vld [vmem:[#allocation8 + $0x10] sm:$0xff]
    %v101 = vld [vmem:[#allocation8 + $0x18] sm:$0xff]
    %v102 = vld [vmem:[#allocation8 + $0x20] sm:$0xff]
    %v103 = vld [vmem:[#allocation8 + $0x28] sm:$0xff]
    %v104 = vld [vmem:[#allocation8 + $0x30] sm:$0xff]
    %v105 = vld [vmem:[#allocation8 + $0x38] sm:$0xff]
    %v106 = vld [vmem:[#allocation8 + $0x40] sm:$0xff]
    %v107 = vld [vmem:[#allocation8 + $0x48] sm:$0xff]
    %v108 = vld [vmem:[#allocation8 + $0x50] sm:$0xff]
    %v109 = vld [vmem:[#allocation8 + $0x58] sm:$0xff]
    %v110 = vld [vmem:[#allocation8 + $0x60] sm:$0xff]
    %v111 = vld [vmem:[#allocation8 + $0x68] sm:$0xff]
    %v112 = vld [vmem:[#allocation8 + $0x70] sm:$0xff]
    %v113 = vld [vmem:[#allocation8 + $0x78] sm:$0xff]
    %114 = vmatpush.msra.mxu0 %v113
    %115 = vmatpush.msra.mxu0 %v112
    %116 = vmatpush.msra.mxu0 %v111
    %117 = vmatpush.msra.mxu0 %v110
    %118 = vmatpush.msra.mxu0 %v109
    %119 = vmatpush.msra.mxu0 %v108
    %120 = vmatpush.msra.mxu0 %v107
    %121 = vmatpush.msra.mxu0 %v106
    %122 = vmatpush.msra.mxu0 %v105
    %123 = vmatpush.msra.mxu0 %v104
    %124 = vmatpush.msra.mxu0 %v103
    %125 = vmatpush.msra.mxu0 %v102
    %126 = vmatpush.msra.mxu0 %v101
    %127 = vmatpush.msra.mxu0 %v100
    %128 = vmatpush.msra.mxu0 %v99
    %129 = vmatpush.msra.mxu0 %v98
    %130 = vmatmul.f32.gmra.mxu0 %v97
    %v131 = vpop.f32.mrf.mxu0
    %v132 = vadd.f32 0.0, %v131
    %133 = vdwg.mxu0
    %134 = vmatpush.msra.mxu0 %v96
    %135 = vmatpush.msra.mxu0 %v95
    %136 = vmatpush.msra.mxu0 %v94
    %137 = vmatpush.msra.mxu0 %v93
    %138 = vmatpush.msra.mxu0 %v92
    %139 = vmatpush.msra.mxu0 %v91
    %140 = vmatpush.msra.mxu0 %v90
    %141 = vmatpush.msra.mxu0 %v89
    %142 = vmatpush.msra.mxu0 %v88
    %143 = vmatpush.msra.mxu0 %v87
    %144 = vmatpush.msra.mxu0 %v86
    %145 = vmatpush.msra.mxu0 %v85
    %146 = vmatpush.msra.mxu0 %v84
    %147 = vmatpush.msra.mxu0 %v83
    %148 = vmatpush.msra.mxu0 %v82
    %149 = vmatpush.msra.mxu0 %v81
    %150 = vmatmul.f32.gmra.mxu0 %v80
    %v151 = vpop.f32.mrf.mxu0
    %v152 = vadd.f32 %v132, %v151
    %153 = vdwg.mxu0
    %v154 = vld [vmem:[%s2] sm:$0x1]
    %v156 = vperm.slane %v154, 0
    %v158 = vadd.f32 %v152, %v156
    %159 = vst [vmem:[#allocation10] sm:$0xff] %v158
    // Predicated region
    $region38: #{tpu_custom_call.1} parent=1 // pred_check
      _
    $region39: #{tpu_custom_call.1} parent=1 // pred_check_branch
      %161 = sbr.rel (0) target = $region41
    $region40: #{tpu_custom_call.1} parent=1 // pred_region
      %163 = vsyncadd [#allocation4], 0
      %s165 = sshll.u32 [#allocation10], 4
      %s166 = int_to_ptr.vmem [resolvable:$true] %s165
      %s167 = sshll.u32 %s5, 4
      %s168 = int_to_ptr.hbm [resolvable:$true] %s167
      %170 = dma.vmem_to_hbm [thread:$0]  %s166, 128, %s168, [#allocation4]
    $region41: #{tpu_custom_call.1} parent=1 // pred_fallthru
      _
    // Predicated region
    $region42: #{tpu_custom_call.1} parent=1 // pred_check
      _
    $region43: #{tpu_custom_call.1} parent=1 // pred_check_branch
      %172 = sbr.rel (0) target = $region45
    $region44: #{tpu_custom_call.1} parent=1 // pred_region
      %174 = dma.done [#allocation4], 128
    $region45: #{tpu_custom_call.1} parent=1 // pred_fallthru
      _
    %175 = vsyncpa [#allocation3], 1
    %176 = vsyncpa [#allocation6], 1
    %177 = vsyncpa [#allocation9], 1
    %178 = vsyncpa [#allocation4], 1

</llo_original>
